<compile_context>
chip_gen: v7x
topology: tpu7x:2x2x1
jax: 0.10.0
libtpu: 0.0.40
codegen_flags: <defaults>
</compile_context>

<pallas_src>
import jax
import jax.numpy as jnp
from jax.experimental import pallas as pl
from jax.experimental.pallas import tpu as pltpu

_MIB = 1024 * 1024


def _edge_features_kernel(e_ref, vxi_ref, vxj_ref, uw_ref, o_ref):
    """One (batch, i-tile, j-tile) grid step.

    e_ref  : (1, TI, TJ, Hp)  edge-feature tile (lane-packed last dim)
    vxi_ref: (1, TI, Hp)      V(x_i) + v_b + u_b   (f32, biases folded in wrapper)
    vxj_ref: (1, TJ, Hp)      V(x_j) + v_b         (f32)
    uw_ref : (Hp, Hp)         U weight in (in, out) layout; block-diagonal when packed
    o_ref  : (1, TI, TJ, Hp)
    """
    ti, tj, hp = e_ref.shape[1], e_ref.shape[2], e_ref.shape[3]

    # Edge projection on the MXU; accumulate in f32.  With TJ a multiple of 8
    # (or equal to the full j extent) and Hp lane-dense, collapsing the leading
    # dims is a free re-layout (no VMEM copy).
    e2 = e_ref[0].reshape(ti * tj, hp)
    ue = jnp.dot(e2, uw_ref[...], preferred_element_type=jnp.float32)
    ue = ue.reshape(ti, tj, hp)

    # e_new[i, j] = Ue[i, j] + Vx_i[i] + Vx_j[j]  (all biases already folded).
    out = ue + vxi_ref[0][:, None, :] + vxj_ref[0][None, :, :]
    o_ref[0] = out.astype(o_ref.dtype)


def _vmem_capacity_bytes():
    """Per-core VMEM capacity; conservative (v7x-sized) fallback if unknown."""
    try:
        info = pltpu.get_tpu_info()
        cap = getattr(info, "vmem_capacity_bytes", None)
        if cap:
            return int(cap)
    except Exception:
        pass
    return 64 * _MIB


def _pick_tiles(n_i, n_j, hp, e_bytes, out_bytes, w_bytes, budget_bytes):
    """Largest (i, j) tile whose double-buffered VMEM working set fits the budget.

    Accounts for: double-buffered e input and output tiles, the f32 MXU result
    tile, the double-buffered vx_i / vx_j vectors, and the (grid-constant but
    still double-buffered) U weight.  Never rounds a too-small tile UP past the
    budget (the old `max(8, ...)` clamp bug).
    """
    per_elem = hp * (2 * e_bytes + 2 * out_bytes + 4)   # e + out (x2 buffers) + f32 Ue
    per_i = 2 * hp * 4                                  # vx_i row (x2 buffers, f32)
    per_j = 2 * hp * 4                                  # vx_j row (x2 buffers, f32)
    fixed = 2 * hp * hp * w_bytes                       # U weight (x2 buffers)
    avail = max(budget_bytes - fixed, per_elem + per_i + per_j)

    # Prefer full-j tiles: the e DMA for each i row is then fully contiguous.
    ti = (avail - n_j * per_j) // (n_j * per_elem + per_i)
    if ti >= min(8, n_i):
        tj = n_j
        ti = min(n_i, ti)
        if ti < n_i:
            ti = (ti // 8) * 8          # sublane-align; ti >= 8 here so never rounds up
        return ti, tj

    # Otherwise tile j as well and keep a minimal sublane-aligned i tile.
    ti = min(n_i, 8)
    tj = (avail - ti * per_i) // (ti * per_elem + per_j)
    tj = min(n_j, max(8, (tj // 8) * 8))
    return ti, tj


def edge_features(x, e, u_w, u_b, v_w, v_b, *,
                  compute_dtype=None,
                  tile_i=None, tile_j=None,
                  vmem_budget_bytes=None,
                  vmem_limit_bytes=None,
                  alias_e=False):
    """EdgeFeatures forward (undirected, dense).

    x   : (B, N, H)      node features
    e   : (B, N, N, H)   edge features
    u_w : (H, H)  U weight in (in, out) layout;  u_b: (H,)
    v_w : (H, H)  V weight in (in, out) layout;  v_b: (H,)
    compute_dtype: optional dtype (e.g. jnp.bfloat16) for e / U / output —
        halves HBM traffic of the dominant tensor; accumulation stays f32.
    Returns (B, N, N, H).  Set alias_e=True only if e is dead after this op.
    """
    B, N, H = x.shape
    assert e.shape == (B, N, N, H)

    if compute_dtype is not None:
        e = e.astype(compute_dtype)
    out_dtype = e.dtype
    uw = u_w.astype(e.dtype)   # matched MXU operand dtypes (bf16 x bf16 -> f32 fast path)

    # Hoisted node projection (O(N*H^2), negligible vs the O(N^2*H^2) edge
    # matmul), biases folded so the kernel only does matmul + broadcast adds.
    hi = jax.lax.Precision.HIGHEST
    xf = x.astype(jnp.float32)
    vx = jnp.dot(xf, v_w.astype(jnp.float32), precision=hi,
                 preferred_element_type=jnp.float32) + v_b.astype(jnp.float32)
    vx_i = vx + u_b.astype(jnp.float32)
    vx_j = vx

    # Lane-dense repack for H < 128: fold k = 128//H adjacent j's into the lane
    # dim so stores are full-lane and the MXU contraction is 128 deep.
    k = 1
    if H < 128 and 128 % H == 0 and N % (128 // H) == 0:
        k = 128 // H
    hp, nj = k * H, N // k
    if k > 1:
        e_in = e.reshape(B, N, nj, hp)                       # contiguous -> free
        uw = jnp.kron(jnp.eye(k, dtype=uw.dtype), uw)        # block-diagonal (Hp, Hp)
        vx_j = vx_j.reshape(B, nj, hp)
        vx_i = jnp.tile(vx_i, (1, 1, k))
    else:
        e_in = e

    # Generation-aware VMEM sizing (large tiles on 128 MiB v5e/v6e, conservative
    # on v7x's 64 MiB), with headroom for Mosaic internal scratch.
    cap = _vmem_capacity_bytes()
    if vmem_limit_bytes is None:
        vmem_limit_bytes = min(int(cap * 0.75), cap - 8 * _MIB)
    if vmem_budget_bytes is None:
        vmem_budget_bytes = max(16 * _MIB, vmem_limit_bytes - 8 * _MIB)

    e_bytes = jnp.dtype(e_in.dtype).itemsize
    out_bytes = jnp.dtype(out_dtype).itemsize
    ti, tj = _pick_tiles(N, nj, hp, e_bytes, out_bytes,
                         jnp.dtype(uw.dtype).itemsize, vmem_budget_bytes)
    if tile_i is not None:
        ti = min(int(tile_i), N)
    if tile_j is not None:
        tj = min(int(tile_j), nj)

    # Keep both v7x TensorCores busy on tiny grids (>= 2 parallel steps).
    if B * pl.cdiv(N, ti) * pl.cdiv(nj, tj) < 2 and N >= 16:
        ti = max(8, (ti // 2) // 8 * 8)

    grid = (B, pl.cdiv(N, ti), pl.cdiv(nj, tj))

    flops = 2 * B * N * nj * hp * hp          # MXU work as executed (packed)
    bytes_accessed = (e_in.size * e_bytes + B * N * nj * hp * out_bytes
                      + vx_i.size * 4 + vx_j.size * 4 + uw.size * e_bytes)

    kwargs = {}
    if alias_e and e_in.dtype == out_dtype:
        kwargs["input_output_aliases"] = {0: 0}  # e_in is the first input

    out = pl.pallas_call(
        _edge_features_kernel,
        out_shape=jax.ShapeDtypeStruct((B, N, nj, hp), out_dtype),
        grid_spec=pltpu.PrefetchScalarGridSpec(
            num_scalar_prefetch=0,
            grid=grid,
            in_specs=[
                pl.BlockSpec((1, ti, tj, hp), lambda b, i, j: (b, i, j, 0)),  # e
                pl.BlockSpec((1, ti, hp),     lambda b, i, j: (b, i, 0)),     # vx_i
                pl.BlockSpec((1, tj, hp),     lambda b, i, j: (b, j, 0)),     # vx_j
                pl.BlockSpec((hp, hp),        lambda b, i, j: (0, 0)),        # U (in,out)
            ],
            out_specs=pl.BlockSpec((1, ti, tj, hp), lambda b, i, j: (b, i, j, 0)),
        ),
        compiler_params=pltpu.CompilerParams(
            dimension_semantics=("parallel", "parallel", "parallel"),
            vmem_limit_bytes=int(vmem_limit_bytes)),
        cost_estimate=pl.CostEstimate(flops=int(flops), transcendentals=0,
                                      bytes_accessed=int(bytes_accessed)),
        **kwargs,
    )(e_in, vx_i, vx_j, uw)

    return out.reshape(B, N, N, H)


def edge_features_ref(x, e, u_w, u_b, v_w, v_b):
    """Pure-JAX reference matching the PyTorch forward (edge_index=None, W=None)."""
    hi = jax.lax.Precision.HIGHEST
    ue = jnp.einsum("bijh,hk->bijk", e, u_w, precision=hi) + u_b
    vx = jnp.einsum("bnh,hk->bnk", x, v_w, precision=hi) + v_b
    return ue + vx[:, :, None, :] + vx[:, None, :, :]


if __name__ == "__main__":
    B, N, H = 2, 8, 32   # batch, num_nodes, hidden_dim
    key = jax.random.PRNGKey(0)
    kx, ke, kuw, kub, kvw, kvb = jax.random.split(key, 6)

    x = jax.random.normal(kx, (B, N, H), dtype=jnp.float32)
    e = jax.random.normal(ke, (B, N, N, H), dtype=jnp.float32)

    # Deterministic "nn.Linear(H, H, bias=True)" parameters.
    # PyTorch stores weight as (out, in); we keep the transposed (in, out) layout.
    scale = 1.0 / jnp.sqrt(H)
    u_w = jax.random.uniform(kuw, (H, H), minval=-scale, maxval=scale, dtype=jnp.float32)
    u_b = jax.random.uniform(kub, (H,),   minval=-scale, maxval=scale, dtype=jnp.float32)
    v_w = jax.random.uniform(kvw, (H, H), minval=-scale, maxval=scale, dtype=jnp.float32)
    v_b = jax.random.uniform(kvb, (H,),   minval=-scale, maxval=scale, dtype=jnp.float32)

    ref = edge_features_ref(x, e, u_w, u_b, v_w, v_b)

    # f32 path (module-default numerics).  Tolerance allows for MXU f32
    # multi-pass rounding differing from the XLA HIGHEST-precision reference.
    out = jax.block_until_ready(edge_features(x, e, u_w, u_b, v_w, v_b))
    assert out.shape == (B, N, N, H)
    assert jnp.allclose(out, ref, atol=2e-2, rtol=2e-2), "f32 mismatch vs reference"

    # bf16 dominant-tensor path (halves HBM traffic); looser tolerance.
    out_bf16 = jax.block_until_ready(
        edge_features(x, e, u_w, u_b, v_w, v_b, compute_dtype=jnp.bfloat16))
    assert out_bf16.dtype == jnp.bfloat16
    assert jnp.allclose(out_bf16.astype(jnp.float32), ref, atol=1.5e-1, rtol=5e-2), \
        "bf16 mismatch vs reference"

    print("KERNEL_OK")
</pallas_src>

<mosaic_0001>
module attributes {stable_mosaic.version = 11 : i64} {
  func.func @_edge_features_kernel(%arg0: i32, %arg1: i32, %arg2: i32, %arg3: memref<1x8x2x128xf32, #tpu.memory_space<vmem>>, %arg4: memref<1x8x128xf32, #tpu.memory_space<vmem>>, %arg5: memref<1x2x128xf32, #tpu.memory_space<vmem>>, %arg6: memref<128x128xf32, #tpu.memory_space<vmem>>, %arg7: memref<1x8x2x128xf32, #tpu.memory_space<vmem>>) attributes {dimension_semantics = [#tpu.dimension_semantics<parallel>, #tpu.dimension_semantics<parallel>, #tpu.dimension_semantics<parallel>], iteration_bounds = array<i64: 2, 1, 1>, scalar_prefetch = 0 : i64, scratch_operands = 0 : i64, tpu.core_type = #tpu.core_type<tc>, window_params = [{transform_indices = @transform_0, window_bounds = array<i64: 1, 8, 2, 128>}, {transform_indices = @transform_1, window_bounds = array<i64: 1, 8, 128>}, {transform_indices = @transform_2, window_bounds = array<i64: 1, 2, 128>}, {pipeline_mode = #tpu.pipeline_mode<synchronous>, transform_indices = @transform_3, window_bounds = array<i64: 128, 128>}, {transform_indices = @transform_4, window_bounds = array<i64: 1, 8, 2, 128>}]} {
    %c0 = arith.constant 0 : index
    %c0_0 = arith.constant 0 : index
    %c0_1 = arith.constant 0 : index
    %c0_2 = arith.constant 0 : index
    %0 = vector.load %arg3[%c0, %c0_0, %c0_1, %c0_2] : memref<1x8x2x128xf32, #tpu.memory_space<vmem>>, vector<1x8x2x128xf32>
    %1 = vector.shape_cast %0 : vector<1x8x2x128xf32> to vector<8x2x128xf32>
    %2 = vector.shape_cast %1 : vector<8x2x128xf32> to vector<16x128xf32>
    %c0_3 = arith.constant 0 : index
    %c0_4 = arith.constant 0 : index
    %3 = vector.load %arg6[%c0_3, %c0_4] : memref<128x128xf32, #tpu.memory_space<vmem>>, vector<128x128xf32>
    %cst = arith.constant dense<0.000000e+00> : vector<16x128xf32>
    %4 = tpu.matmul %2, %3, %cst {dimension_numbers = #tpu.dot_dimension_numbers<[1], [0], [0], [1], [0, 0, 1, 1], [], []>} : vector<16x128xf32>, vector<128x128xf32>, vector<16x128xf32> -> vector<16x128xf32>
    %5 = vector.shape_cast %4 : vector<16x128xf32> to vector<8x2x128xf32>
    %c0_5 = arith.constant 0 : index
    %c0_6 = arith.constant 0 : index
    %c0_7 = arith.constant 0 : index
    %6 = vector.load %arg4[%c0_5, %c0_6, %c0_7] : memref<1x8x128xf32, #tpu.memory_space<vmem>>, vector<1x8x128xf32>
    %7 = vector.shape_cast %6 : vector<1x8x128xf32> to vector<8x128xf32>
    %8 = vector.shape_cast %7 : vector<8x128xf32> to vector<8x1x128xf32>
    %9 = vector.broadcast %8 : vector<8x1x128xf32> to vector<8x2x128xf32>
    %10 = arith.addf %5, %9 : vector<8x2x128xf32>
    %c0_8 = arith.constant 0 : index
    %c0_9 = arith.constant 0 : index
    %c0_10 = arith.constant 0 : index
    %11 = vector.load %arg5[%c0_8, %c0_9, %c0_10] : memref<1x2x128xf32, #tpu.memory_space<vmem>>, vector<1x2x128xf32>
    %12 = vector.shape_cast %11 : vector<1x2x128xf32> to vector<2x128xf32>
    %13 = vector.shape_cast %12 : vector<2x128xf32> to vector<1x2x128xf32>
    %14 = vector.broadcast %13 : vector<1x2x128xf32> to vector<8x2x128xf32>
    %15 = arith.addf %10, %14 : vector<8x2x128xf32>
    %c0_11 = arith.constant 0 : index
    %c0_12 = arith.constant 0 : index
    %c0_13 = arith.constant 0 : index
    %c0_14 = arith.constant 0 : index
    %16 = vector.load %arg7[%c0_11, %c0_12, %c0_13, %c0_14] : memref<1x8x2x128xf32, #tpu.memory_space<vmem>>, vector<1x8x2x128xf32>
    %17 = vector.shape_cast %16 : vector<1x8x2x128xf32> to vector<8x2x128xf32>
    %18 = vector.shape_cast %15 : vector<8x2x128xf32> to vector<1x8x2x128xf32>
    tpu.vector_store %arg7[%c0_11, %c0_12, %c0_13, %c0_14], %18 {strides = array<i32>} : memref<1x8x2x128xf32, #tpu.memory_space<vmem>>, vector<1x8x2x128xf32>,
    return
  }
  func.func @transform_0(%arg0: i32, %arg1: i32, %arg2: i32) -> (i32, i32, i32, i32) {
    %c0_i32 = arith.constant 0 : i32
    %c0_i32_0 = arith.constant 0 : i32
    return %arg0, %arg1, %arg2, %c0_i32 : i32, i32, i32, i32
  }
  func.func @transform_1(%arg0: i32, %arg1: i32, %arg2: i32) -> (i32, i32, i32) {
    %c0_i32 = arith.constant 0 : i32
    %c0_i32_0 = arith.constant 0 : i32
    return %arg0, %arg1, %c0_i32 : i32, i32, i32
  }
  func.func @transform_2(%arg0: i32, %arg1: i32, %arg2: i32) -> (i32, i32, i32) {
    %c0_i32 = arith.constant 0 : i32
    %c0_i32_0 = arith.constant 0 : i32
    return %arg0, %arg2, %c0_i32 : i32, i32, i32
  }
  func.func @transform_3(%arg0: i32, %arg1: i32, %arg2: i32) -> (i32, i32) {
    %c0_i32 = arith.constant 0 : i32
    %c0_i32_0 = arith.constant 0 : i32
    %c0_i32_1 = arith.constant 0 : i32
    return %c0_i32, %c0_i32_0 : i32, i32
  }
  func.func @transform_4(%arg0: i32, %arg1: i32, %arg2: i32) -> (i32, i32, i32, i32) {
    %c0_i32 = arith.constant 0 : i32
    %c0_i32_0 = arith.constant 0 : i32
    return %arg0, %arg1, %arg2, %c0_i32 : i32, i32, i32, i32
  }
}

</mosaic_0001>

<llo_original>
// kernel: tpu_custom_call.1
$region0: #{tpu_custom_call.1}
  #allocation0 [shape = 'u32[]', space=smem, size = 0x4, offset = 0x4, fixed_abs, tag = 'smem constant byte address 0x4 - core index']
  #allocation1 [shape = 'u32[144,128]{1,0:T(1,128)}', space=vmem, size = 0x12000, scoped, tag = 'internal scratch']
  %s0 = inlined_call_operand.hbm [shape: f32[2,8,2,128], index: 0, kind: input, shape index: {}]
  %s1 = inlined_call_operand.hbm [shape: f32[2,8,128], index: 1, kind: input, shape index: {}]
  %s2 = inlined_call_operand.vmem [shape: f32[2,2,128], index: 2, kind: input, shape index: {}]
  %s3 = inlined_call_operand.hbm [shape: f32[128,128], index: 3, kind: input, shape index: {}]
  %s4 = inlined_call_operand.hbm [shape: f32[2,8,2,128], index: 4, kind: output, shape index: {}]
  %s5 = sld [smem:[#allocation0]]
  $region61: #{tpu_custom_call.1} parent=0
    _
  %s7 = ssub.s32 1, %s5
  %s8 = scalar_select 0, %s7, %s5
  $region1: #{tpu_custom_call.1} parent=0
    #allocation2 [shape = 'u8[16384]{0}', space=vmem, size = 0x4000, scoped, tag = 'input window, operand 0']
    #allocation3 [shape = 's32[2]{0}', space=sflag, size = 0x8, scoped, tag = 'scoped memory for tpu_custom_call.1']
    #allocation4 [shape = 's32[2]{0}', space=sflag, size = 0x8, scoped, tag = 'scoped memory for tpu_custom_call.1']
    #allocation5 [shape = 'u8[8192]{0}', space=vmem, size = 0x2000, scoped, tag = 'input window, operand 1']
    #allocation6 [shape = 's32[2]{0}', space=sflag, size = 0x8, scoped, tag = 'scoped memory for tpu_custom_call.1']
    #allocation7 [shape = 'u8[65536]{0}', space=vmem, size = 0x10000, scoped, tag = 'input window, operand 3, single buffered']
    #allocation8 [shape = 'u8[16384]{0}', space=vmem, size = 0x4000, scoped, tag = 'output window, operand 0']
    %9 = vsyncpa [#allocation3], 0
    %s10 = scalar_lea.sflag [#allocation3], 1
    %11 = vsyncpa %s10, 0
    %12 = vsyncpa [#allocation6], 0
    %s13 = scalar_lea.sflag [#allocation6], 1
    %14 = vsyncpa %s13, 0
    %15 = vsyncpa [#allocation4], 0
    %s16 = scalar_lea.sflag [#allocation4], 1
    %17 = vsyncpa %s16, 0
    loop: start=0, step=1, limit=4
    $region2: #{tpu_custom_call.1} parent=1 // loop_pre_header
      _
    $region3: #{tpu_custom_call.1} parent=1 // loop_header
      %s19 = sphi 0, %s23
      %p20 = scmp.ge.s32.totalorder %s19, 4
      %s26 = sphi 0, %s45
      %s27 = sphi 0, %s41
      %s28 = sphi 0, %s37
      %s29 = sphi 0, %s26
      %s30 = sphi 0, %s27
      %s31 = sphi 0, %s28
      %s32 = sphi 0, %s29
      %s33 = sphi 0, %s30
      %s34 = sphi 0, %s31
      %s52 = sphi 0, %s54
      %s55 = sphi 0, %s52
      %s56 = sphi 0, %s55
      %s72 = sphi 0, %s56
      %s80 = sphi 0, %s82
      %s83 = sphi 0, %s80
      %s84 = sphi 0, %s83
      %s100 = sphi 0, %s84
      %s108 = sphi 0, %s110
      %s111 = sphi 0, %s108
      %s112 = sphi 0, %s111
      %s128 = sphi 0, %s112
      %s132 = sphi 0, %s132
      %s134 = sphi 0, %s132
      %s135 = sphi 0, %s134
      %s149 = sphi 0, %s135
      %s159 = sphi 0, %s161
      %s162 = sphi 0, %s159
      %s163 = sphi 0, %s162
      %s179 = sphi 0, %s163
    $region4: #{tpu_custom_call.1} parent=1 // loop_header_branch
      %22 = sbr.rel (%p20) target = $region8
    $region5: #{tpu_custom_call.1} parent=1 // loop_body
      %s24 = ssub.s32 %s19, 1
      %s25 = ssub.s32 %s19, 2
      %s35 = sadd.s32 1, %s28
      %p36 = scmp.ge.s32.totalorder %s35, 1
      %s37 = scalar_select %p36, 0, %s35
      %s38 = sadd.s32 1, %s27
      %s39 = scalar_select %p36, %s38, %s27
      %p40 = scmp.ge.s32.totalorder %s39, 1
      %s41 = scalar_select %p40, 0, %s39
      %s42 = sadd.s32 1, %s26
      %s43 = scalar_select %p40, %s42, %s26
      %p44 = scmp.ge.s32.totalorder %s43, 2
      %s45 = scalar_select %p44, 0, %s43
      %s46 = ssub.s32 %s26, %s45
      %s47 = ssub.s32 %s27, %s41
      %s48 = sor.u32 %s46, %s47
      %s49 = ssub.s32 %s28, %s37
      %s50 = sor.u32 %s48, %s49
      %p51 = scmp.eq.s32.totalorder %s50, 0
      %s53 = sadd.s32 %s52, 1
      %s54 = scalar_select %p51, %s52, %s53
      %p57 = pneg %p51
      %p58 = scmp.eq.s32.totalorder %s19, 1
      %p59 = por %p57, %p58
      %p60 = scmp.ne.s32.totalorder %s52, %s55
      %p61 = scmp.eq.s32.totalorder %s19, 0
      %p62 = por %p60, %p61
      %p63 = scmp.ne.s32.totalorder %s52, %s55
      %p64 = scmp.eq.s32.totalorder %s24, 1
      %p65 = por %p63, %p64
      %p66 = scmp.ne.s32.totalorder %s55, %s56
      %p67 = scmp.eq.s32.totalorder %s24, 0
      %p68 = por %p66, %p67
      %p69 = scmp.ne.s32.totalorder %s55, %s56
      %p70 = scmp.eq.s32.totalorder %s25, 1
      %p71 = por %p69, %p70
      %p73 = scmp.ne.s32.totalorder %s56, %s72
      %p74 = scmp.eq.s32.totalorder %s25, 0
      %p75 = por %p73, %p74
      %s76 = ssub.s32 %s26, %s45
      %s77 = ssub.s32 %s27, %s41
      %s78 = sor.u32 %s76, %s77
      %p79 = scmp.eq.s32.totalorder %s78, 0
      %s81 = sadd.s32 %s80, 1
      %s82 = scalar_select %p79, %s80, %s81
      %p85 = pneg %p79
      %p86 = scmp.eq.s32.totalorder %s19, 1
      %p87 = por %p85, %p86
      %p88 = scmp.ne.s32.totalorder %s80, %s83
      %p89 = scmp.eq.s32.totalorder %s19, 0
      %p90 = por %p88, %p89
      %p91 = scmp.ne.s32.totalorder %s80, %s83
      %p92 = scmp.eq.s32.totalorder %s24, 1
      %p93 = por %p91, %p92
      %p94 = scmp.ne.s32.totalorder %s83, %s84
      %p95 = scmp.eq.s32.totalorder %s24, 0
      %p96 = por %p94, %p95
      %p97 = scmp.ne.s32.totalorder %s83, %s84
      %p98 = scmp.eq.s32.totalorder %s25, 1
      %p99 = por %p97, %p98
      %p101 = scmp.ne.s32.totalorder %s84, %s100
      %p102 = scmp.eq.s32.totalorder %s25, 0
      %p103 = por %p101, %p102
      %s104 = ssub.s32 %s26, %s45
      %s105 = ssub.s32 %s28, %s37
      %s106 = sor.u32 %s104, %s105
      %p107 = scmp.eq.s32.totalorder %s106, 0
      %s109 = sadd.s32 %s108, 1
      %s110 = scalar_select %p107, %s108, %s109
      %p113 = pneg %p107
      %p114 = scmp.eq.s32.totalorder %s19, 1
      %p115 = por %p113, %p114
      %p116 = scmp.ne.s32.totalorder %s108, %s111
      %p117 = scmp.eq.s32.totalorder %s19, 0
      %p118 = por %p116, %p117
      %p119 = scmp.ne.s32.totalorder %s108, %s111
      %p120 = scmp.eq.s32.totalorder %s24, 1
      %p121 = por %p119, %p120
      %p122 = scmp.ne.s32.totalorder %s111, %s112
      %p123 = scmp.eq.s32.totalorder %s24, 0
      %p124 = por %p122, %p123
      %p125 = scmp.ne.s32.totalorder %s111, %s112
      %p126 = scmp.eq.s32.totalorder %s25, 1
      %p127 = por %p125, %p126
      %p129 = scmp.ne.s32.totalorder %s112, %s128
      %p130 = scmp.eq.s32.totalorder %s25, 0
      %p131 = por %p129, %p130
      %s133 = sadd.s32 %s132, 1
      %p136 = scmp.eq.s32.totalorder %s19, 1
      %p137 = scmp.ne.s32.totalorder %s132, %s134
      %p138 = scmp.eq.s32.totalorder %s19, 0
      %p139 = por %p137, %p138
      %p140 = scmp.ne.s32.totalorder %s132, %s134
      %p141 = scmp.eq.s32.totalorder %s24, 1
      %p142 = por %p140, %p141
      %p143 = scmp.ne.s32.totalorder %s134, %s135
      %p144 = scmp.eq.s32.totalorder %s24, 0
      %p145 = por %p143, %p144
      %p146 = scmp.ne.s32.totalorder %s134, %s135
      %p147 = scmp.eq.s32.totalorder %s25, 1
      %p148 = por %p146, %p147
      %p150 = scmp.ne.s32.totalorder %s135, %s149
      %p151 = scmp.eq.s32.totalorder %s25, 0
      %p152 = por %p150, %p151
      %s153 = ssub.s32 %s26, %s45
      %s154 = ssub.s32 %s27, %s41
      %s155 = sor.u32 %s153, %s154
      %s156 = ssub.s32 %s28, %s37
      %s157 = sor.u32 %s155, %s156
      %p158 = scmp.eq.s32.totalorder %s157, 0
      %s160 = sadd.s32 %s159, 1
      %s161 = scalar_select %p158, %s159, %s160
      %p164 = pneg %p158
      %p165 = scmp.eq.s32.totalorder %s19, 1
      %p166 = por %p164, %p165
      %p167 = scmp.ne.s32.totalorder %s159, %s162
      %p168 = scmp.eq.s32.totalorder %s19, 0
      %p169 = por %p167, %p168
      %p170 = scmp.ne.s32.totalorder %s159, %s162
      %p171 = scmp.eq.s32.totalorder %s24, 1
      %p172 = por %p170, %p171
      %p173 = scmp.ne.s32.totalorder %s162, %s163
      %p174 = scmp.eq.s32.totalorder %s24, 0
      %p175 = por %p173, %p174
      %p176 = scmp.ne.s32.totalorder %s162, %s163
      %p177 = scmp.eq.s32.totalorder %s25, 1
      %p178 = por %p176, %p177
      %p180 = scmp.ne.s32.totalorder %s163, %s179
      %p181 = scmp.eq.s32.totalorder %s25, 0
      %p182 = por %p180, %p181
      %p183 = scmp.le.s32.totalorder 1, %s19
      %p184 = scmp.lt.s32.totalorder %s19, 3
      %p185 = pnand %p183, %p184
      %p186 = pneg %p185
      // Predicated region
      $region9: #{tpu_custom_call.1} parent=5 // pred_check
        _
      $region10: #{tpu_custom_call.1} parent=5 // pred_check_branch
        %188 = sbr.rel (%p185) target = $region12
      $region11: #{tpu_custom_call.1} parent=5 // pred_region
        %s189 = ssub.s32 %s19, 1
        // Predicated region
        $region13: #{tpu_custom_call.1} parent=11 // pred_check
          %p190 = pneg %p145
        $region14: #{tpu_custom_call.1} parent=11 // pred_check_branch
          %192 = sbr.rel (%p190) target = $region16
        $region15: #{tpu_custom_call.1} parent=11 // pred_region
          %s194 = ssub.s32 2048, 2048
          %195 = vsyncadd [#allocation6], %s194
          %s196 = sshll.u32 [#allocation7], 4
          %s197 = int_to_ptr.vmem [resolvable:$true] %s196
          %202 = dma.hbm_to_vmem [thread:$0]  %s3, 2048, %s197, [#allocation6], 128, 128, 8
        $region16: #{tpu_custom_call.1} parent=11 // pred_fallthru
          _
      $region12: #{tpu_custom_call.1} parent=5 // pred_fallthru
        _
      %p203 = scmp.lt.s32.totalorder %s19, 2
      // Predicated region
      $region17: #{tpu_custom_call.1} parent=5 // pred_check
        %p204 = pneg %p203
      $region18: #{tpu_custom_call.1} parent=5 // pred_check_branch
        %206 = sbr.rel (%p204) target = $region20
      $region19: #{tpu_custom_call.1} parent=5 // pred_region
        // Predicated region
        $region21: #{tpu_custom_call.1} parent=19 // pred_check
          %p207 = pneg %p62
        $region22: #{tpu_custom_call.1} parent=19 // pred_check_branch
          %209 = sbr.rel (%p207) target = $region24
        $region23: #{tpu_custom_call.1} parent=19 // pred_region
          %s210 = sand.u32 %s52, 1
          %s211 = scalar_lea.sflag [#allocation3], %s210
          %s212 = sand.u32 %s52, 1
          %s213 = smul.addr %s212, 16
          %s214 = scalar_lea.vmem [#allocation2], %s213
          %s215 = smul.u32 8, %s27
          %s217 = ssub.s32 256, 256
          %218 = vsyncadd %s211, %s217
          %s219 = sadd.s32 %s28, %s215
          %s220 = smul.addr %s26, 8
          %s221 = sadd.s32 %s219, %s220
          %s222 = smul.addr %s221, 32
          %s223 = scalar_lea.hbm %s0, %s222
          %s224 = sshll.u32 %s214, 4
          %s225 = int_to_ptr.vmem [resolvable:$true] %s224
          %230 = dma.hbm_to_vmem [thread:$0]  %s223, 256, %s225, %s211, 32, 32, 2
        $region24: #{tpu_custom_call.1} parent=19 // pred_fallthru
          _
        // Predicated region
        $region25: #{tpu_custom_call.1} parent=19 // pred_check
          %p231 = pneg %p90
        $region26: #{tpu_custom_call.1} parent=19 // pred_check_branch
          %233 = sbr.rel (%p231) target = $region28
        $region27: #{tpu_custom_call.1} parent=19 // pred_region
          %s234 = sand.u32 %s19, 1
          %s235 = scalar_lea.sflag [#allocation6], %s234
          %s236 = sand.u32 %s80, 1
          %s237 = smul.addr %s236, 8
          %s238 = scalar_lea.vmem [#allocation5], %s237
          %s240 = ssub.s32 128, 128
          %241 = vsyncadd %s235, %s240
          %s242 = sadd.s32 %s27, %s26
          %s243 = smul.addr %s242, 128
          %s244 = scalar_lea.hbm %s1, %s243
          %s246 = sshll.u32 %s238, 4
          %s247 = int_to_ptr.vmem [resolvable:$true] %s246
          %249 = dma.hbm_to_vmem [thread:$0]  %s244, 128, %s247, %s235
        $region28: #{tpu_custom_call.1} parent=19 // pred_fallthru
          _
        // Predicated region
        $region29: #{tpu_custom_call.1} parent=19 // pred_check
          %p250 = pneg %p118
        $region30: #{tpu_custom_call.1} parent=19 // pred_check_branch
          %252 = sbr.rel (%p250) target = $region32
        $region31: #{tpu_custom_call.1} parent=19 // pred_region
          %p253 = scmp.lt.s32.totalorder %s26, 1
          %s254 = scalar_select %p253, %s26, 1
          %p255 = scmp.lt.s32.totalorder %s28, 0
          %s256 = scalar_select %p255, %s28, 0
          %s257 = sadd.s32 %s256, %s254
          %s258 = smul.addr %s257, 2
          %s259 = scalar_lea.vmem %s2, %s258
        $region32: #{tpu_custom_call.1} parent=19 // pred_fallthru
          _
      $region20: #{tpu_custom_call.1} parent=5 // pred_fallthru
        _
      %p260 = scmp.le.s32.totalorder 1, %s19
      %p261 = scmp.lt.s32.totalorder %s19, 3
      %p262 = pnand %p260, %p261
      %p263 = pneg %p262
      // Predicated region
      $region33: #{tpu_custom_call.1} parent=5 // pred_check
        _
      $region34: #{tpu_custom_call.1} parent=5 // pred_check_branch
        %265 = sbr.rel (%p262) target = $region36
      $region35: #{tpu_custom_call.1} parent=5 // pred_region
        %s266 = ssub.s32 %s19, 1
        %s267 = sand.u32 %s55, 1
        %s268 = scalar_lea.sflag [#allocation3], %s267
        %s269 = sand.u32 %s55, 1
        %s270 = smul.addr %s269, 16
        %s271 = scalar_lea.vmem [#allocation2], %s270
        // Predicated region
        $region37: #{tpu_custom_call.1} parent=35 // pred_check
          %p272 = pneg %p68
        $region38: #{tpu_custom_call.1} parent=35 // pred_check_branch
          %274 = sbr.rel (%p272) target = $region40
        $region39: #{tpu_custom_call.1} parent=35 // pred_region
          %275 = dma.done %s268, 256
        $region40: #{tpu_custom_call.1} parent=35 // pred_fallthru
          _
        %s276 = sand.u32 %s24, 1
        %s277 = scalar_lea.sflag [#allocation6], %s276
        %s278 = sand.u32 %s83, 1
        %s279 = smul.addr %s278, 8
        %s280 = scalar_lea.vmem [#allocation5], %s279
        // Predicated region
        $region41: #{tpu_custom_call.1} parent=35 // pred_check
          %p281 = pneg %p96
        $region42: #{tpu_custom_call.1} parent=35 // pred_check_branch
          %283 = sbr.rel (%p281) target = $region44
        $region43: #{tpu_custom_call.1} parent=35 // pred_region
          %284 = dma.done %s277, 128
        $region44: #{tpu_custom_call.1} parent=35 // pred_fallthru
          _
        // Predicated region
        $region45: #{tpu_custom_call.1} parent=35 // pred_check
          %p285 = pneg %p145
        $region46: #{tpu_custom_call.1} parent=35 // pred_check_branch
          %287 = sbr.rel (%p285) target = $region48
        $region47: #{tpu_custom_call.1} parent=35 // pred_region
          %288 = dma.done [#allocation6], 2048
        $region48: #{tpu_custom_call.1} parent=35 // pred_fallthru
          _
        %s289 = sand.u32 %s55, 1
        %s290 = scalar_lea.sflag [#allocation3], %s289
        %s291 = sand.u32 %s55, 1
        %s292 = smul.addr %s291, 16
        %s293 = scalar_lea.vmem [#allocation2], %s292
        %p294 = pneg %p68
        %p295 = pneg %p65
        %s296 = sand.u32 %s24, 1
        %s297 = scalar_lea.sflag [#allocation6], %s296
        %s298 = sand.u32 %s83, 1
        %s299 = smul.addr %s298, 8
        %s300 = scalar_lea.vmem [#allocation5], %s299
        %p301 = pneg %p96
        %p302 = pneg %p93
        %p303 = scmp.lt.s32.totalorder %s29, 1
        %s304 = scalar_select %p303, %s29, 1
        %p305 = scmp.lt.s32.totalorder %s31, 0
        %s306 = scalar_select %p305, %s31, 0
        %s307 = sadd.s32 %s306, %s304
        %s308 = smul.addr %s307, 2
        %s309 = scalar_lea.vmem %s2, %s308
        %p310 = pneg %p124
        %p311 = pneg %p121
        %p312 = pneg %p145
        %p313 = pneg %p142
        %p314 = pneg %p175
        %p315 = pneg %p172
        %s316 = sand.u32 %s162, 1
        %s317 = scalar_lea.sflag [#allocation4], %s316
        %s318 = sand.u32 %s162, 1
        %s319 = smul.addr %s318, 16
        %s320 = scalar_lea.vmem [#allocation8], %s319
        %s321 = smul.u32 8, %s30
        %p322 = scmp.lt.s32.totalorder %s29, 1
        %s323 = scalar_select %p322, %s29, 1
        %p324 = scmp.lt.s32.totalorder %s31, 0
        %s325 = scalar_select %p324, %s31, 0
        %s326 = sadd.s32 %s325, %s323
        %s327 = smul.addr %s326, 2
        %s328 = scalar_lea.vmem %s2, %s327
        %s329 = smul.u32 8, %s30
        %v330 = vld [vmem:[%s271] sm:$0x3]
        %v331 = vld [vmem:[%s271 + $0x2] sm:$0x3]
        %v332 = vld [vmem:[%s271 + $0x4] sm:$0x3]
        %v333 = vld [vmem:[%s271 + $0x6] sm:$0x3]
        %v334 = vld [vmem:[%s271 + $0x8] sm:$0x3]
        %v335 = vld [vmem:[%s271 + $0xa] sm:$0x3]
        %v336 = vld [vmem:[%s271 + $0xc] sm:$0x3]
        %v337 = vld [vmem:[%s271 + $0xe] sm:$0x3]
        %v338 = vld [vmem:[#allocation7] sm:$0xff]
        %v339 = vld [vmem:[#allocation7 + $0x8] sm:$0xff]
        %v340 = vld [vmem:[#allocation7 + $0x10] sm:$0xff]
        %v341 = vld [vmem:[#allocation7 + $0x18] sm:$0xff]
        %v342 = vld [vmem:[#allocation7 + $0x20] sm:$0xff]
        %v343 = vld [vmem:[#allocation7 + $0x28] sm:$0xff]
        %v344 = vld [vmem:[#allocation7 + $0x30] sm:$0xff]
        %v345 = vld [vmem:[#allocation7 + $0x38] sm:$0xff]
        %v346 = vld [vmem:[#allocation7 + $0x40] sm:$0xff]
        %v347 = vld [vmem:[#allocation7 + $0x48] sm:$0xff]
        %v348 = vld [vmem:[#allocation7 + $0x50] sm:$0xff]
        %v349 = vld [vmem:[#allocation7 + $0x58] sm:$0xff]
        %v350 = vld [vmem:[#allocation7 + $0x60] sm:$0xff]
        %v351 = vld [vmem:[#allocation7 + $0x68] sm:$0xff]
        %v352 = vld [vmem:[#allocation7 + $0x70] sm:$0xff]
        %v353 = vld [vmem:[#allocation7 + $0x78] sm:$0xff]
        %v362 = vcombine.low %v330, %v331
        %v363 = vcombine.low %v332, %v333
        %v365 = vunpack.c.l.s4 1983009808
        %v366 = vunpack.c.0.s8 %v365
        %v367 = vlaneseq
        %v368 = vshrl.u32 %v367, 7
        %v369 = vsub.s32 %v366, %v368
        %v370 = vrot.slane %v362, %v369
        %v372 = vunpack.c.l.s4 1983009808
        %v373 = vunpack.c.0.s8 %v372
        %v374 = vlaneseq
        %v375 = vshrl.u32 %v374, 7
        %v376 = vsub.s32 %v373, %v375
        %v377 = vrot.slane %v363, %v376
        %v378 = vcombine.low %v370, %v377
        %v379 = vcombine.low %v334, %v335
        %v380 = vcombine.low %v336, %v337
        %v382 = vunpack.c.l.s4 1983009808
        %v383 = vunpack.c.0.s8 %v382
        %v384 = vlaneseq
        %v385 = vshrl.u32 %v384, 7
        %v386 = vsub.s32 %v383, %v385
        %v387 = vrot.slane %v379, %v386
        %v389 = vunpack.c.l.s4 1983009808
        %v390 = vunpack.c.0.s8 %v389
        %v391 = vlaneseq
        %v392 = vshrl.u32 %v391, 7
        %v393 = vsub.s32 %v390, %v392
        %v394 = vrot.slane %v380, %v393
        %v395 = vcombine.low %v387, %v394
        %398 = vmatprep.subr.mxu0 0.0
        %399 = vmatpush1.msra.mxu0 %v338
        %400 = vmatprep.subr.mxu0 0.0
        %401 = vmatpush1.msra.mxu0 %v339
        %402 = vmatprep.subr.mxu0 0.0
        %403 = vmatpush1.msra.mxu0 %v340
        %404 = vmatprep.subr.mxu0 0.0
        %405 = vmatpush1.msra.mxu0 %v341
        %406 = vmatprep.subr.mxu0 0.0
        %407 = vmatpush1.msra.mxu0 %v342
        %408 = vmatprep.subr.mxu0 0.0
        %409 = vmatpush1.msra.mxu0 %v343
        %410 = vmatprep.subr.mxu0 0.0
        %411 = vmatpush1.msra.mxu0 %v344
        %412 = vmatprep.subr.mxu0 0.0
        %413 = vmatpush1.msra.mxu0 %v345
        %414 = vmatprep.subr.mxu0 0.0
        %415 = vmatpush1.msra.mxu0 %v346
        %416 = vmatprep.subr.mxu0 0.0
        %417 = vmatpush1.msra.mxu0 %v347
        %418 = vmatprep.subr.mxu0 0.0
        %419 = vmatpush1.msra.mxu0 %v348
        %420 = vmatprep.subr.mxu0 0.0
        %421 = vmatpush1.msra.mxu0 %v349
        %422 = vmatprep.subr.mxu0 0.0
        %423 = vmatpush1.msra.mxu0 %v350
        %424 = vmatprep.subr.mxu0 0.0
        %425 = vmatpush1.msra.mxu0 %v351
        %426 = vmatprep.subr.mxu0 0.0
        %427 = vmatpush1.msra.mxu0 %v352
        %428 = vmatprep.subr.mxu0 0.0
        %429 = vmatpush1.msra.mxu0 %v353
        %430 = vmatprep.subr.mxu0 0.0
        %431 = vmatpush1.msra.mxu0 0.0
        %432 = vmatprep.subr.mxu0 0.0
        %433 = vmatpush1.msra.mxu0 0.0
        %434 = vmatprep.subr.mxu0 0.0
        %435 = vmatpush1.msra.mxu0 0.0
        %436 = vmatprep.subr.mxu0 0.0
        %437 = vmatpush1.msra.mxu0 0.0
        %438 = vmatprep.subr.mxu0 0.0
        %439 = vmatpush1.msra.mxu0 0.0
        %440 = vmatprep.subr.mxu0 0.0
        %441 = vmatpush1.msra.mxu0 0.0
        %442 = vmatprep.subr.mxu0 0.0
        %443 = vmatpush1.msra.mxu0 0.0
        %444 = vmatprep.subr.mxu0 0.0
        %445 = vmatpush1.msra.mxu0 0.0
        %446 = vmatprep.subr.mxu0 0.0
        %447 = vmatpush1.msra.mxu0 0.0
        %448 = vmatprep.subr.mxu0 0.0
        %449 = vmatpush1.msra.mxu0 0.0
        %450 = vmatprep.subr.mxu0 0.0
        %451 = vmatpush1.msra.mxu0 0.0
        %452 = vmatprep.subr.mxu0 0.0
        %453 = vmatpush1.msra.mxu0 0.0
        %454 = vmatprep.subr.mxu0 0.0
        %455 = vmatpush1.msra.mxu0 0.0
        %456 = vmatprep.subr.mxu0 0.0
        %457 = vmatpush1.msra.mxu0 0.0
        %458 = vmatprep.subr.mxu0 0.0
        %459 = vmatpush1.msra.mxu0 0.0
        %460 = vmatprep.subr.mxu0 0.0
        %461 = vmatpush1.msra.mxu0 0.0
        %462 = vmatprep.mubr.f32.mxu0 0.0
        %463 = vmatmul.mubr.f32.gmra.mrb[0].mxu0 %v378
        %v464 = vpop.f32.mrb[0].mxu0
        %v465 = vadd.f32 0.0, %v464
        %v466 = vpop.f32.mrb[0].mxu0
        %467 = vmatprep.mubr.f32.mxu0 0.0
        %468 = vmatmul.mubr.f32.gmra.mrb[0].mxu0 %v395
        %v469 = vpop.f32.mrb[0].mxu0
        %v470 = vadd.f32 0.0, %v469
        %v471 = vpop.f32.mrb[0].mxu0
        %472 = vdwg.mxu0
        %v475 = vcombine.high %v465, %v465
        %v477 = vunpack.c.l.s4 1983009808
        %v478 = vunpack.c.0.s8 %v477
        %v479 = vlaneseq
        %v480 = vshrl.u32 %v479, 7
        %v481 = vsub.s32 %v478, %v480
        %v482 = vrot.slane %v465, %v481
        %v484 = vunpack.c.l.s4 1983009808
        %v485 = vunpack.c.0.s8 %v484
        %v486 = vlaneseq
        %v487 = vshrl.u32 %v486, 7
        %v488 = vsub.s32 %v485, %v487
        %v489 = vrot.slane %v475, %v488
        %v490 = vcombine.high %v482, %v482
        %v491 = vcombine.high %v489, %v489
        %v492 = vcombine.high %v470, %v470
        %v494 = vunpack.c.l.s4 1983009808
        %v495 = vunpack.c.0.s8 %v494
        %v496 = vlaneseq
        %v497 = vshrl.u32 %v496, 7
        %v498 = vsub.s32 %v495, %v497
        %v499 = vrot.slane %v470, %v498
        %v501 = vunpack.c.l.s4 1983009808
        %v502 = vunpack.c.0.s8 %v501
        %v503 = vlaneseq
        %v504 = vshrl.u32 %v503, 7
        %v505 = vsub.s32 %v502, %v504
        %v506 = vrot.slane %v492, %v505
        %v507 = vcombine.high %v499, %v499
        %v508 = vcombine.high %v506, %v506
        %v517 = vld [vmem:[%s280] sm:$0xff]
        %v519 = vcombine.high %v517, %v517
        %v521 = vunpack.c.l.s4 1966171168
        %v522 = vunpack.c.0.s8 %v521
        %v523 = vlaneseq
        %v524 = vshrl.u32 %v523, 7
        %v525 = vsub.s32 %v522, %v524
        %v526 = vrot.slane %v517, %v525
        %v528 = vunpack.c.l.s4 1966171168
        %v529 = vunpack.c.0.s8 %v528
        %v530 = vlaneseq
        %v531 = vshrl.u32 %v530, 7
        %v532 = vsub.s32 %v529, %v531
        %v533 = vrot.slane %v519, %v532
        %v534 = vcombine.high %v526, %v526
        %v535 = vcombine.high %v533, %v533
        %v537 = vunpack.c.l.s4 1966171168
        %v538 = vunpack.c.0.s8 %v537
        %v539 = vlaneseq
        %v540 = vshrl.u32 %v539, 7
        %v541 = vsub.s32 %v538, %v540
        %v542 = vrot.slane %v526, %v541
        %v544 = vunpack.c.l.s4 1966171168
        %v545 = vunpack.c.0.s8 %v544
        %v546 = vlaneseq
        %v547 = vshrl.u32 %v546, 7
        %v548 = vsub.s32 %v545, %v547
        %v549 = vrot.slane %v533, %v548
        %v551 = vunpack.c.l.s4 1966171168
        %v552 = vunpack.c.0.s8 %v551
        %v553 = vlaneseq
        %v554 = vshrl.u32 %v553, 7
        %v555 = vsub.s32 %v552, %v554
        %v556 = vrot.slane %v534, %v555
        %v558 = vunpack.c.l.s4 1966171168
        %v559 = vunpack.c.0.s8 %v558
        %v560 = vlaneseq
        %v561 = vshrl.u32 %v560, 7
        %v562 = vsub.s32 %v559, %v561
        %v563 = vrot.slane %v535, %v562
        %v564 = vcombine.high %v542, %v542
        %v565 = vcombine.high %v549, %v549
        %v566 = vcombine.high %v556, %v556
        %v567 = vcombine.high %v563, %v563
        %v568 = vlaneseq
        %v569 = vshrl.u32 %v568, 7
        %v570 = vsub.s32 0, %v569
        %v571 = vrot.slane %v542, %v570
        %v572 = vlaneseq
        %v573 = vshrl.u32 %v572, 7
        %v574 = vsub.s32 0, %v573
        %v575 = vrot.slane %v556, %v574
        %v576 = vlaneseq
        %v577 = vshrl.u32 %v576, 7
        %v578 = vsub.s32 0, %v577
        %v579 = vrot.slane %v564, %v578
        %v580 = vlaneseq
        %v581 = vshrl.u32 %v580, 7
        %v582 = vsub.s32 0, %v581
        %v583 = vrot.slane %v566, %v582
        %v584 = vlaneseq
        %v585 = vshrl.u32 %v584, 7
        %v586 = vsub.s32 0, %v585
        %v587 = vrot.slane %v549, %v586
        %v588 = vlaneseq
        %v589 = vshrl.u32 %v588, 7
        %v590 = vsub.s32 0, %v589
        %v591 = vrot.slane %v563, %v590
        %v592 = vlaneseq
        %v593 = vshrl.u32 %v592, 7
        %v594 = vsub.s32 0, %v593
        %v595 = vrot.slane %v565, %v594
        %v596 = vlaneseq
        %v597 = vshrl.u32 %v596, 7
        %v598 = vsub.s32 0, %v597
        %v599 = vrot.slane %v567, %v598
        %v608 = vadd.f32 %v482, %v571
        %v609 = vadd.f32 %v490, %v575
        %v610 = vadd.f32 %v489, %v579
        %v611 = vadd.f32 %v491, %v583
        %v612 = vadd.f32 %v499, %v587
        %v613 = vadd.f32 %v507, %v591
        %v614 = vadd.f32 %v506, %v595
        %v615 = vadd.f32 %v508, %v599
        %v616 = vld [vmem:[%s328] sm:$0x3]
        %v617 = vadd.f32 %v608, %v616
        %v618 = vadd.f32 %v609, %v616
        %v619 = vadd.f32 %v610, %v616
        %v620 = vadd.f32 %v611, %v616
        %v621 = vadd.f32 %v612, %v616
        %v622 = vadd.f32 %v613, %v616
        %v623 = vadd.f32 %v614, %v616
        %v624 = vadd.f32 %v615, %v616
        %625 = vst [vmem:[%s320] sm:$0x3] %v617
        %626 = vst [vmem:[%s320 + $0x2] sm:$0x3] %v618
        %627 = vst [vmem:[%s320 + $0x4] sm:$0x3] %v619
        %628 = vst [vmem:[%s320 + $0x6] sm:$0x3] %v620
        %629 = vst [vmem:[%s320 + $0x8] sm:$0x3] %v621
        %630 = vst [vmem:[%s320 + $0xa] sm:$0x3] %v622
        %631 = vst [vmem:[%s320 + $0xc] sm:$0x3] %v623
        %632 = vst [vmem:[%s320 + $0xe] sm:$0x3] %v624
        %s633 = sand.u32 %s162, 1
        %s634 = scalar_lea.sflag [#allocation4], %s633
        %s635 = sand.u32 %s162, 1
        %s636 = smul.addr %s635, 16
        %s637 = scalar_lea.vmem [#allocation8], %s636
        // Predicated region
        $region49: #{tpu_custom_call.1} parent=35 // pred_check
          %p638 = pneg %p172
        $region50: #{tpu_custom_call.1} parent=35 // pred_check_branch
          %640 = sbr.rel (%p638) target = $region52
        $region51: #{tpu_custom_call.1} parent=35 // pred_region
          %s641 = smul.u32 8, %s30
          %s643 = ssub.s32 256, 256
          %644 = vsyncadd %s634, %s643
          %s645 = sadd.s32 %s31, %s641
          %s646 = smul.addr %s29, 8
          %s647 = sadd.s32 %s645, %s646
          %s648 = smul.addr %s647, 32
          %s649 = scalar_lea.hbm %s4, %s648
          %s650 = sshll.u32 %s637, 4
          %s651 = int_to_ptr.vmem [resolvable:$true] %s650
          %656 = dma.vmem_to_hbm [thread:$0]  %s651, 256, %s649, %s634, 32, 32, 2
        $region52: #{tpu_custom_call.1} parent=35 // pred_fallthru
          _
      $region36: #{tpu_custom_call.1} parent=5 // pred_fallthru
        _
      %p657 = scmp.le.s32.totalorder 2, %s19
      // Predicated region
      $region53: #{tpu_custom_call.1} parent=5 // pred_check
        %p658 = pneg %p657
      $region54: #{tpu_custom_call.1} parent=5 // pred_check_branch
        %660 = sbr.rel (%p658) target = $region56
      $region55: #{tpu_custom_call.1} parent=5 // pred_region
        %s661 = ssub.s32 %s19, 2
        // Predicated region
        $region57: #{tpu_custom_call.1} parent=55 // pred_check
          %p662 = pneg %p178
        $region58: #{tpu_custom_call.1} parent=55 // pred_check_branch
          %664 = sbr.rel (%p662) target = $region60
        $region59: #{tpu_custom_call.1} parent=55 // pred_region
          %s665 = sand.u32 %s163, 1
          %s666 = scalar_lea.sflag [#allocation4], %s665
          %s667 = sand.u32 %s163, 1
          %s668 = smul.addr %s667, 16
          %s669 = scalar_lea.vmem [#allocation8], %s668
          %670 = dma.done %s666, 256
        $region60: #{tpu_custom_call.1} parent=55 // pred_fallthru
          _
      $region56: #{tpu_custom_call.1} parent=5 // pred_fallthru
        _
    $region6: #{tpu_custom_call.1} parent=1 // loop_footer
      %s23 = sadd.s32 1, %s19
    $region7: #{tpu_custom_call.1} parent=1 // loop_footer_branch
      %18 = sbr.rel target = $region3
    $region8: #{tpu_custom_call.1} parent=1 // loop_exit
      _
    %671 = vsyncpa [#allocation3], 1
    %s672 = scalar_lea.sflag [#allocation3], 1
    %673 = vsyncpa %s672, 1
    %674 = vsyncpa [#allocation6], 1
    %s675 = scalar_lea.sflag [#allocation6], 1
    %676 = vsyncpa %s675, 1
    %677 = vsyncpa [#allocation4], 1
    %s678 = scalar_lea.sflag [#allocation4], 1
    %679 = vsyncpa %s678, 1

</llo_original>
